<compile_context>
chip_gen: v7x
topology: tpu7x:2x2x1
jax: 0.10.0
libtpu: 0.0.40
codegen_flags: <defaults>
</compile_context>

<pallas_src>
import functools

import jax
import jax.numpy as jnp
import numpy as np
from jax.experimental import pallas as pl
from jax.experimental.pallas import tpu as pltpu

LN_EPS = 1e-5  # PyTorch nn.LayerNorm default eps.


def _gelu_exact(x):
    # PyTorch nn.GELU() default = exact erf formulation.
    return 0.5 * x * (1.0 + jax.lax.erf(x * jnp.float32(0.7071067811865476)))


def meta_prior_kernel(*args, n_feats):
    """args = feat_refs[0..n_feats-1], gamma, beta, w1, b1, w2, b2, res, out."""
    feat_refs = args[:n_feats]
    (gamma_ref, beta_ref, w1_ref, b1_ref, w2_ref, b2_ref,
     res_ref, out_ref) = args[n_feats:]

    d = feat_refs[0].shape[-1]
    inv_d = jnp.float32(1.0 / d)
    gamma = gamma_ref[...]            # (1, D): VPU sublane-broadcasts in place
    beta = beta_ref[...]

    def layernorm(x):
        # One-pass stats: biased var = E[x^2] - mean^2, eps inside rsqrt (f32).
        x = x.astype(jnp.float32)
        mean = jnp.sum(x, axis=-1, keepdims=True) * inv_d
        mean_sq = jnp.sum(x * x, axis=-1, keepdims=True) * inv_d
        var = mean_sq - mean * mean
        return (x - mean) * jax.lax.rsqrt(var + LN_EPS) * gamma + beta

    text = feat_refs[0][...].astype(jnp.float32)

    # First Linear as accumulated per-feature dots: no (tm, n_feats*D) concat
    # buffer; absent (None) features were folded into b1 on the host.
    h = jnp.dot(layernorm(text), w1_ref[0], preferred_element_type=jnp.float32)
    for j in range(1, n_feats):
        h = h + jnp.dot(layernorm(feat_refs[j][...]), w1_ref[j],
                        preferred_element_type=jnp.float32)
    h = _gelu_exact(h + b1_ref[...])

    meta = jnp.dot(h, w2_ref[...], preferred_element_type=jnp.float32) + b2_ref[...]
    out_ref[...] = (meta + res_ref[0] * text).astype(out_ref.dtype)


def init_params(key, in_dim):
    kg, kb, k1, k2, k3, k4 = jax.random.split(key, 6)
    return {
        # Non-trivial gamma/beta so the LN(0)==beta folding path is actually tested.
        "ln_gamma": 1.0 + 0.1 * jax.random.normal(kg, (in_dim,), jnp.float32),
        "ln_beta": 0.1 * jax.random.normal(kb, (in_dim,), jnp.float32),
        "w1": jax.random.normal(k1, (4 * in_dim, in_dim), jnp.float32) * 0.02,
        "b1": jax.random.normal(k2, (in_dim,), jnp.float32) * 0.01,
        "w2": jax.random.normal(k3, (in_dim, in_dim), jnp.float32) * 0.02,
        "b2": jax.random.normal(k4, (in_dim,), jnp.float32) * 0.01,
        "res_weight": jnp.ones((1,), jnp.float32),
    }


def _round_up(x, m):
    return ((x + m - 1) // m) * m


def meta_prior(params, text_feat, img_feat, appearance_feat=None, spec_feat=None,
               *, tile_m=None):
    orig_shape = text_feat.shape
    D = int(orig_shape[-1])
    M = int(np.prod(orig_shape[:-1]))

    # --- Select present features; fold LN(0) == beta of absent ones into b1. ---
    feats = [text_feat, img_feat, appearance_feat, spec_feat]
    present_idx = [k for k in range(4) if feats[k] is not None]
    present = [feats[k].reshape(M, D) for k in present_idx]
    nf = len(present)

    w1 = params["w1"]                          # (4D, D), K grouped [text|img|app|spec]
    beta = params["ln_beta"]
    b1_eff = params["b1"]
    for k in range(4):
        if k not in present_idx:
            # LayerNorm(zeros) == beta -> constant contribution to fc[0]: fold it.
            b1_eff = b1_eff + beta @ w1[k * D:(k + 1) * D, :]
    w1p = jnp.stack([w1[k * D:(k + 1) * D, :] for k in present_idx], axis=0)  # (nf, D, D)
    w2 = params["w2"]

    gamma_r = params["ln_gamma"].reshape(1, D)
    beta_r = beta.reshape(1, D)
    b1_r = b1_eff.reshape(1, D)
    b2_r = params["b2"].reshape(1, D)
    res = params["res_weight"].reshape(1).astype(jnp.float32)   # SMEM scalar

    # --- Row tile: large tiles for small D (amortize ~0.35us/step and the LN
    #     cross-lane reductions), capped so the grid has >= 2 steps (v7x has
    #     two TensorCores; a 1-step "parallel" grid leaves one idle). ---
    M8 = _round_up(M, 8)
    if tile_m is None:
        tile_m = 512 if D <= 256 else (256 if D <= 1024 else 128)
    if M8 >= 16:
        half = max(8, (M8 // 16) * 8)          # largest multiple of 8 <= M8/2
        tm = min(tile_m, half)
    else:
        tm = M8
    tm = max(8, (tm // 8) * 8)
    grid = (pl.cdiv(M, tm),)                   # non-divisible M: Pallas masks the tail

    itemsize = text_feat.dtype.itemsize
    w_bytes = (nf * D * D + D * D) * 4 + 4 * D * 4
    # Single-buffer the grid-invariant weights once they are big enough for the
    # default double-buffering to matter for VMEM (relevant on v7x: 64 MiB).
    single_buffer_w = w_bytes > (2 << 20)
    w_kwargs = {"pipeline_mode": pl.Buffered(1)} if single_buffer_w else {}

    row_spec = pl.BlockSpec((tm, D), lambda i: (i, 0))
    vec_spec = pl.BlockSpec((1, D), lambda i: (0, 0))
    w1_spec = pl.BlockSpec((nf, D, D), lambda i: (0, 0, 0), **w_kwargs)
    w2_spec = pl.BlockSpec((D, D), lambda i: (0, 0), **w_kwargs)

    # TODO(synk): for very large D (w1 >= ~16 MiB f32) add an N/K grid axis
    # (accumulator scratch + pl.when init/finalize) and/or cast w1/w2 + LN
    # outputs to bf16 so the weight-resident layout fits v7x's 64 MiB VMEM.

    vmem_est = ((nf + 1) * tm * D * max(itemsize, 4) * 2       # streamed feats + out, 2x buffered
                + w_bytes * (1 if single_buffer_w else 2)
                + 6 * tm * D * 4)                              # in-kernel f32 temps
    cp_kwargs = dict(dimension_semantics=("parallel",))
    if vmem_est > (30 << 20):
        cp_kwargs["vmem_limit_bytes"] = int(min(vmem_est * 1.25 + (4 << 20), 128 << 20))

    out = pl.pallas_call(
        functools.partial(meta_prior_kernel, n_feats=nf),
        out_shape=jax.ShapeDtypeStruct((M, D), text_feat.dtype),
        grid=grid,
        in_specs=[row_spec] * nf + [
            vec_spec,                                  # ln gamma
            vec_spec,                                  # ln beta
            w1_spec,                                   # w1 (present K-blocks only)
            vec_spec,                                  # b1 (absent blocks folded in)
            w2_spec,                                   # w2
            vec_spec,                                  # b2
            pl.BlockSpec(memory_space=pltpu.SMEM),     # res_weight (1,)
        ],
        out_specs=row_spec,
        compiler_params=pltpu.CompilerParams(**cp_kwargs),
    )(*present, gamma_r, beta_r, w1p, b1_r, w2, b2_r, res)

    return out.reshape(orig_shape)


def meta_prior_ref(params, text_feat, img_feat, appearance_feat=None, spec_feat=None):
    """Pure-JAX reference mirroring the PyTorch forward exactly."""
    feats = [text_feat, img_feat,
             appearance_feat if appearance_feat is not None else jnp.zeros_like(text_feat),
             spec_feat if spec_feat is not None else jnp.zeros_like(text_feat)]
    g = params["ln_gamma"]
    b = params["ln_beta"]

    def ln(x):
        mean = jnp.mean(x, axis=-1, keepdims=True)
        xc = x - mean
        var = jnp.mean(xc * xc, axis=-1, keepdims=True)
        return xc * jax.lax.rsqrt(var + LN_EPS) * g + b

    meta = jnp.concatenate([ln(f) for f in feats], axis=-1)
    meta = meta @ params["w1"] + params["b1"]
    meta = 0.5 * meta * (1.0 + jax.lax.erf(meta / jnp.sqrt(2.0)))
    meta = meta @ params["w2"] + params["b2"]
    return meta + params["res_weight"][0] * text_feat


if __name__ == "__main__":
    B, S, D = 2, 8, 32   # M = 16 rows -> tm = 8, grid = (2,)
    key = jax.random.PRNGKey(0)
    kp, kt, ki, ka, ks = jax.random.split(key, 5)

    params = init_params(kp, D)
    text = jax.random.normal(kt, (B, S, D), jnp.float32)
    img = jax.random.normal(ki, (B, S, D), jnp.float32)
    app = jax.random.normal(ka, (B, S, D), jnp.float32)
    spec = jax.random.normal(ks, (B, S, D), jnp.float32)

    # Path 1: spec_feat=None exercises the LN(0)==beta fold (no zero-feature DMA/LN).
    out = jax.block_until_ready(
        meta_prior(params, text, img, appearance_feat=app, spec_feat=None))
    ref = meta_prior_ref(params, text, img, appearance_feat=app, spec_feat=None)
    np.testing.assert_allclose(np.asarray(out), np.asarray(ref), atol=2e-5, rtol=2e-5)

    # Path 2: all four features present.
    out2 = jax.block_until_ready(
        meta_prior(params, text, img, appearance_feat=app, spec_feat=spec))
    ref2 = meta_prior_ref(params, text, img, appearance_feat=app, spec_feat=spec)
    np.testing.assert_allclose(np.asarray(out2), np.asarray(ref2), atol=2e-5, rtol=2e-5)

    print("KERNEL_OK")
</pallas_src>

<mosaic_0001>
module attributes {stable_mosaic.version = 11 : i64} {
  func.func @meta_prior_kernel(%arg0: i32, %arg1: memref<8x32xf32, #tpu.memory_space<vmem>>, %arg2: memref<8x32xf32, #tpu.memory_space<vmem>>, %arg3: memref<8x32xf32, #tpu.memory_space<vmem>>, %arg4: memref<1x32xf32, #tpu.memory_space<vmem>>, %arg5: memref<1x32xf32, #tpu.memory_space<vmem>>, %arg6: memref<3x32x32xf32, #tpu.memory_space<vmem>>, %arg7: memref<1x32xf32, #tpu.memory_space<vmem>>, %arg8: memref<32x32xf32, #tpu.memory_space<vmem>>, %arg9: memref<1x32xf32, #tpu.memory_space<vmem>>, %arg10: memref<1xf32, #tpu.memory_space<smem>>, %arg11: memref<8x32xf32, #tpu.memory_space<vmem>>) attributes {dimension_semantics = [#tpu.dimension_semantics<parallel>], iteration_bounds = array<i64: 2>, scalar_prefetch = 0 : i64, scratch_operands = 0 : i64, tpu.core_type = #tpu.core_type<tc>, window_params = [{transform_indices = @transform_0, window_bounds = array<i64: 8, 32>}, {transform_indices = @transform_1, window_bounds = array<i64: 8, 32>}, {transform_indices = @transform_2, window_bounds = array<i64: 8, 32>}, {pipeline_mode = #tpu.pipeline_mode<synchronous>, transform_indices = @transform_3, window_bounds = array<i64: 1, 32>}, {pipeline_mode = #tpu.pipeline_mode<synchronous>, transform_indices = @transform_4, window_bounds = array<i64: 1, 32>}, {pipeline_mode = #tpu.pipeline_mode<synchronous>, transform_indices = @transform_5, window_bounds = array<i64: 3, 32, 32>}, {pipeline_mode = #tpu.pipeline_mode<synchronous>, transform_indices = @transform_6, window_bounds = array<i64: 1, 32>}, {pipeline_mode = #tpu.pipeline_mode<synchronous>, transform_indices = @transform_7, window_bounds = array<i64: 32, 32>}, {pipeline_mode = #tpu.pipeline_mode<synchronous>, transform_indices = @transform_8, window_bounds = array<i64: 1, 32>}, {transform_indices = @transform_9, window_bounds = array<i64: 1>}, {transform_indices = @transform_10, window_bounds = array<i64: 8, 32>}]} {
    %c0 = arith.constant 0 : index
    %c0_0 = arith.constant 0 : index
    %0 = vector.load %arg4[%c0, %c0_0] : memref<1x32xf32, #tpu.memory_space<vmem>>, vector<1x32xf32>
    %c0_1 = arith.constant 0 : index
    %c0_2 = arith.constant 0 : index
    %1 = vector.load %arg5[%c0_1, %c0_2] : memref<1x32xf32, #tpu.memory_space<vmem>>, vector<1x32xf32>
    %c0_3 = arith.constant 0 : index
    %c0_4 = arith.constant 0 : index
    %2 = vector.load %arg1[%c0_3, %c0_4] : memref<8x32xf32, #tpu.memory_space<vmem>>, vector<8x32xf32>
    %cst = arith.constant dense<0.000000e+00> : vector<8xf32>
    %3 = vector.multi_reduction <add>, %2, %cst [1] : vector<8x32xf32> to vector<8xf32>
    %4 = vector.shape_cast %3 : vector<8xf32> to vector<8x1xf32>
    %cst_5 = arith.constant 3.125000e-02 : f32
    %5 = vector.broadcast %cst_5 : f32 to vector<8x1xf32>
    %6 = arith.mulf %4, %5 : vector<8x1xf32>
    %7 = arith.mulf %2, %2 : vector<8x32xf32>
    %cst_6 = arith.constant dense<0.000000e+00> : vector<8xf32>
    %8 = vector.multi_reduction <add>, %7, %cst_6 [1] : vector<8x32xf32> to vector<8xf32>
    %9 = vector.shape_cast %8 : vector<8xf32> to vector<8x1xf32>
    %cst_7 = arith.constant 3.125000e-02 : f32
    %10 = vector.broadcast %cst_7 : f32 to vector<8x1xf32>
    %11 = arith.mulf %9, %10 : vector<8x1xf32>
    %12 = arith.mulf %6, %6 : vector<8x1xf32>
    %13 = arith.subf %11, %12 : vector<8x1xf32>
    %14 = vector.broadcast %6 : vector<8x1xf32> to vector<8x32xf32>
    %15 = arith.subf %2, %14 : vector<8x32xf32>
    %cst_8 = arith.constant 9.99999974E-6 : f32
    %16 = vector.broadcast %cst_8 : f32 to vector<8x1xf32>
    %17 = arith.addf %13, %16 : vector<8x1xf32>
    %18 = math.rsqrt %17 : vector<8x1xf32>
    %19 = vector.broadcast %18 : vector<8x1xf32> to vector<8x32xf32>
    %20 = arith.mulf %15, %19 : vector<8x32xf32>
    %21 = vector.broadcast %0 : vector<1x32xf32> to vector<8x32xf32>
    %22 = arith.mulf %20, %21 : vector<8x32xf32>
    %23 = vector.broadcast %1 : vector<1x32xf32> to vector<8x32xf32>
    %24 = arith.addf %22, %23 : vector<8x32xf32>
    %c0_9 = arith.constant 0 : index
    %c0_10 = arith.constant 0 : index
    %c0_11 = arith.constant 0 : index
    %25 = vector.load %arg6[%c0_9, %c0_10, %c0_11] : memref<3x32x32xf32, #tpu.memory_space<vmem>>, vector<1x32x32xf32>
    %26 = vector.shape_cast %25 : vector<1x32x32xf32> to vector<32x32xf32>
    %cst_12 = arith.constant dense<0.000000e+00> : vector<8x32xf32>
    %27 = tpu.matmul %24, %26, %cst_12 {dimension_numbers = #tpu.dot_dimension_numbers<[1], [0], [0], [1], [0, 0, 1, 1], [], []>} : vector<8x32xf32>, vector<32x32xf32>, vector<8x32xf32> -> vector<8x32xf32>
    %c0_13 = arith.constant 0 : index
    %c0_14 = arith.constant 0 : index
    %28 = vector.load %arg2[%c0_13, %c0_14] : memref<8x32xf32, #tpu.memory_space<vmem>>, vector<8x32xf32>
    %cst_15 = arith.constant dense<0.000000e+00> : vector<8xf32>
    %29 = vector.multi_reduction <add>, %28, %cst_15 [1] : vector<8x32xf32> to vector<8xf32>
    %30 = vector.shape_cast %29 : vector<8xf32> to vector<8x1xf32>
    %cst_16 = arith.constant 3.125000e-02 : f32
    %31 = vector.broadcast %cst_16 : f32 to vector<8x1xf32>
    %32 = arith.mulf %30, %31 : vector<8x1xf32>
    %33 = arith.mulf %28, %28 : vector<8x32xf32>
    %cst_17 = arith.constant dense<0.000000e+00> : vector<8xf32>
    %34 = vector.multi_reduction <add>, %33, %cst_17 [1] : vector<8x32xf32> to vector<8xf32>
    %35 = vector.shape_cast %34 : vector<8xf32> to vector<8x1xf32>
    %cst_18 = arith.constant 3.125000e-02 : f32
    %36 = vector.broadcast %cst_18 : f32 to vector<8x1xf32>
    %37 = arith.mulf %35, %36 : vector<8x1xf32>
    %38 = arith.mulf %32, %32 : vector<8x1xf32>
    %39 = arith.subf %37, %38 : vector<8x1xf32>
    %40 = vector.broadcast %32 : vector<8x1xf32> to vector<8x32xf32>
    %41 = arith.subf %28, %40 : vector<8x32xf32>
    %cst_19 = arith.constant 9.99999974E-6 : f32
    %42 = vector.broadcast %cst_19 : f32 to vector<8x1xf32>
    %43 = arith.addf %39, %42 : vector<8x1xf32>
    %44 = math.rsqrt %43 : vector<8x1xf32>
    %45 = vector.broadcast %44 : vector<8x1xf32> to vector<8x32xf32>
    %46 = arith.mulf %41, %45 : vector<8x32xf32>
    %47 = vector.broadcast %0 : vector<1x32xf32> to vector<8x32xf32>
    %48 = arith.mulf %46, %47 : vector<8x32xf32>
    %49 = vector.broadcast %1 : vector<1x32xf32> to vector<8x32xf32>
    %50 = arith.addf %48, %49 : vector<8x32xf32>
    %c1 = arith.constant 1 : index
    %c0_20 = arith.constant 0 : index
    %c0_21 = arith.constant 0 : index
    %51 = vector.load %arg6[%c1, %c0_20, %c0_21] : memref<3x32x32xf32, #tpu.memory_space<vmem>>, vector<1x32x32xf32>
    %52 = vector.shape_cast %51 : vector<1x32x32xf32> to vector<32x32xf32>
    %cst_22 = arith.constant dense<0.000000e+00> : vector<8x32xf32>
    %53 = tpu.matmul %50, %52, %cst_22 {dimension_numbers = #tpu.dot_dimension_numbers<[1], [0], [0], [1], [0, 0, 1, 1], [], []>} : vector<8x32xf32>, vector<32x32xf32>, vector<8x32xf32> -> vector<8x32xf32>
    %54 = arith.addf %27, %53 : vector<8x32xf32>
    %c0_23 = arith.constant 0 : index
    %c0_24 = arith.constant 0 : index
    %55 = vector.load %arg3[%c0_23, %c0_24] : memref<8x32xf32, #tpu.memory_space<vmem>>, vector<8x32xf32>
    %cst_25 = arith.constant dense<0.000000e+00> : vector<8xf32>
    %56 = vector.multi_reduction <add>, %55, %cst_25 [1] : vector<8x32xf32> to vector<8xf32>
    %57 = vector.shape_cast %56 : vector<8xf32> to vector<8x1xf32>
    %cst_26 = arith.constant 3.125000e-02 : f32
    %58 = vector.broadcast %cst_26 : f32 to vector<8x1xf32>
    %59 = arith.mulf %57, %58 : vector<8x1xf32>
    %60 = arith.mulf %55, %55 : vector<8x32xf32>
    %cst_27 = arith.constant dense<0.000000e+00> : vector<8xf32>
    %61 = vector.multi_reduction <add>, %60, %cst_27 [1] : vector<8x32xf32> to vector<8xf32>
    %62 = vector.shape_cast %61 : vector<8xf32> to vector<8x1xf32>
    %cst_28 = arith.constant 3.125000e-02 : f32
    %63 = vector.broadcast %cst_28 : f32 to vector<8x1xf32>
    %64 = arith.mulf %62, %63 : vector<8x1xf32>
    %65 = arith.mulf %59, %59 : vector<8x1xf32>
    %66 = arith.subf %64, %65 : vector<8x1xf32>
    %67 = vector.broadcast %59 : vector<8x1xf32> to vector<8x32xf32>
    %68 = arith.subf %55, %67 : vector<8x32xf32>
    %cst_29 = arith.constant 9.99999974E-6 : f32
    %69 = vector.broadcast %cst_29 : f32 to vector<8x1xf32>
    %70 = arith.addf %66, %69 : vector<8x1xf32>
    %71 = math.rsqrt %70 : vector<8x1xf32>
    %72 = vector.broadcast %71 : vector<8x1xf32> to vector<8x32xf32>
    %73 = arith.mulf %68, %72 : vector<8x32xf32>
    %74 = vector.broadcast %0 : vector<1x32xf32> to vector<8x32xf32>
    %75 = arith.mulf %73, %74 : vector<8x32xf32>
    %76 = vector.broadcast %1 : vector<1x32xf32> to vector<8x32xf32>
    %77 = arith.addf %75, %76 : vector<8x32xf32>
    %c2 = arith.constant 2 : index
    %c0_30 = arith.constant 0 : index
    %c0_31 = arith.constant 0 : index
    %78 = vector.load %arg6[%c2, %c0_30, %c0_31] : memref<3x32x32xf32, #tpu.memory_space<vmem>>, vector<1x32x32xf32>
    %79 = vector.shape_cast %78 : vector<1x32x32xf32> to vector<32x32xf32>
    %cst_32 = arith.constant dense<0.000000e+00> : vector<8x32xf32>
    %80 = tpu.matmul %77, %79, %cst_32 {dimension_numbers = #tpu.dot_dimension_numbers<[1], [0], [0], [1], [0, 0, 1, 1], [], []>} : vector<8x32xf32>, vector<32x32xf32>, vector<8x32xf32> -> vector<8x32xf32>
    %81 = arith.addf %54, %80 : vector<8x32xf32>
    %c0_33 = arith.constant 0 : index
    %c0_34 = arith.constant 0 : index
    %82 = vector.load %arg7[%c0_33, %c0_34] : memref<1x32xf32, #tpu.memory_space<vmem>>, vector<1x32xf32>
    %83 = vector.broadcast %82 : vector<1x32xf32> to vector<8x32xf32>
    %84 = arith.addf %81, %83 : vector<8x32xf32>
    %cst_35 = arith.constant 5.000000e-01 : f32
    %85 = vector.broadcast %cst_35 : f32 to vector<8x32xf32>
    %86 = arith.mulf %85, %84 : vector<8x32xf32>
    %cst_36 = arith.constant 0.707106769 : f32
    %87 = vector.broadcast %cst_36 : f32 to vector<8x32xf32>
    %88 = arith.mulf %84, %87 : vector<8x32xf32>
    %89 = math.erf %88 : vector<8x32xf32>
    %cst_37 = arith.constant 1.000000e+00 : f32
    %90 = vector.broadcast %cst_37 : f32 to vector<8x32xf32>
    %91 = arith.addf %90, %89 : vector<8x32xf32>
    %92 = arith.mulf %86, %91 : vector<8x32xf32>
    %c0_38 = arith.constant 0 : index
    %c0_39 = arith.constant 0 : index
    %93 = vector.load %arg8[%c0_38, %c0_39] : memref<32x32xf32, #tpu.memory_space<vmem>>, vector<32x32xf32>
    %cst_40 = arith.constant dense<0.000000e+00> : vector<8x32xf32>
    %94 = tpu.matmul %92, %93, %cst_40 {dimension_numbers = #tpu.dot_dimension_numbers<[1], [0], [0], [1], [0, 0, 1, 1], [], []>} : vector<8x32xf32>, vector<32x32xf32>, vector<8x32xf32> -> vector<8x32xf32>
    %c0_41 = arith.constant 0 : index
    %c0_42 = arith.constant 0 : index
    %95 = vector.load %arg9[%c0_41, %c0_42] : memref<1x32xf32, #tpu.memory_space<vmem>>, vector<1x32xf32>
    %96 = vector.broadcast %95 : vector<1x32xf32> to vector<8x32xf32>
    %97 = arith.addf %94, %96 : vector<8x32xf32>
    %c0_43 = arith.constant 0 : index
    %98 = memref.load %arg10[%c0_43] : memref<1xf32, #tpu.memory_space<smem>>
    %99 = vector.broadcast %98 : f32 to vector<8x32xf32>
    %100 = arith.mulf %99, %2 : vector<8x32xf32>
    %101 = arith.addf %97, %100 : vector<8x32xf32>
    %c0_44 = arith.constant 0 : index
    %c0_45 = arith.constant 0 : index
    %102 = vector.load %arg11[%c0_44, %c0_45] : memref<8x32xf32, #tpu.memory_space<vmem>>, vector<8x32xf32>
    tpu.vector_store %arg11[%c0_44, %c0_45], %101 {strides = array<i32>} : memref<8x32xf32, #tpu.memory_space<vmem>>, vector<8x32xf32>,
    return
  }
  func.func @transform_0(%arg0: i32) -> (i32, i32) {
    %c0_i32 = arith.constant 0 : i32
    %c0_i32_0 = arith.constant 0 : i32
    return %arg0, %c0_i32 : i32, i32
  }
  func.func @transform_1(%arg0: i32) -> (i32, i32) {
    %c0_i32 = arith.constant 0 : i32
    %c0_i32_0 = arith.constant 0 : i32
    return %arg0, %c0_i32 : i32, i32
  }
  func.func @transform_2(%arg0: i32) -> (i32, i32) {
    %c0_i32 = arith.constant 0 : i32
    %c0_i32_0 = arith.constant 0 : i32
    return %arg0, %c0_i32 : i32, i32
  }
  func.func @transform_3(%arg0: i32) -> (i32, i32) {
    %c0_i32 = arith.constant 0 : i32
    %c0_i32_0 = arith.constant 0 : i32
    %c0_i32_1 = arith.constant 0 : i32
    return %c0_i32, %c0_i32_0 : i32, i32
  }
  func.func @transform_4(%arg0: i32) -> (i32, i32) {
    %c0_i32 = arith.constant 0 : i32
    %c0_i32_0 = arith.constant 0 : i32
    %c0_i32_1 = arith.constant 0 : i32
    return %c0_i32, %c0_i32_0 : i32, i32
  }
  func.func @transform_5(%arg0: i32) -> (i32, i32, i32) {
    %c0_i32 = arith.constant 0 : i32
    %c0_i32_0 = arith.constant 0 : i32
    %c0_i32_1 = arith.constant 0 : i32
    %c0_i32_2 = arith.constant 0 : i32
    return %c0_i32, %c0_i32_0, %c0_i32_1 : i32, i32, i32
  }
  func.func @transform_6(%arg0: i32) -> (i32, i32) {
    %c0_i32 = arith.constant 0 : i32
    %c0_i32_0 = arith.constant 0 : i32
    %c0_i32_1 = arith.constant 0 : i32
    return %c0_i32, %c0_i32_0 : i32, i32
  }
  func.func @transform_7(%arg0: i32) -> (i32, i32) {
    %c0_i32 = arith.constant 0 : i32
    %c0_i32_0 = arith.constant 0 : i32
    %c0_i32_1 = arith.constant 0 : i32
    return %c0_i32, %c0_i32_0 : i32, i32
  }
  func.func @transform_8(%arg0: i32) -> (i32, i32) {
    %c0_i32 = arith.constant 0 : i32
    %c0_i32_0 = arith.constant 0 : i32
    %c0_i32_1 = arith.constant 0 : i32
    return %c0_i32, %c0_i32_0 : i32, i32
  }
  func.func @transform_9(%arg0: i32) -> i32 {
    %c0_i32 = arith.constant 0 : i32
    %c0_i32_0 = arith.constant 0 : i32
    return %c0_i32 : i32
  }
  func.func @transform_10(%arg0: i32) -> (i32, i32) {
    %c0_i32 = arith.constant 0 : i32
    %c0_i32_0 = arith.constant 0 : i32
    return %arg0, %c0_i32 : i32, i32
  }
}

</mosaic_0001>

<llo_original>
// kernel: tpu_custom_call.1
$region0: #{tpu_custom_call.1}
  #allocation0 [shape = 'u32[]', space=smem, size = 0x4, offset = 0x4, fixed_abs, tag = 'smem constant byte address 0x4 - core index']
  #allocation1 [shape = 'u32[144,128]{1,0:T(1,128)}', space=vmem, size = 0x12000, scoped, tag = 'internal scratch']
  #allocation2 [shape = 'f32[1]{0:T(128)S(6)}', space=smem, size = 0x200, scoped, tag = 'scoped memory for tpu_custom_call.1']
  %s0 = inlined_call_operand.hbm [shape: f32[16,32], index: 0, kind: input, shape index: {}]
  %s1 = inlined_call_operand.hbm [shape: f32[16,32], index: 1, kind: input, shape index: {}]
  %s2 = inlined_call_operand.hbm [shape: f32[16,32], index: 2, kind: input, shape index: {}]
  %s3 = inlined_call_operand.vmem [shape: f32[1,32], index: 3, kind: input, shape index: {}]
  %s4 = inlined_call_operand.vmem [shape: f32[1,32], index: 4, kind: input, shape index: {}]
  %s5 = inlined_call_operand.hbm [shape: f32[3,32,32], index: 5, kind: input, shape index: {}]
  %s6 = inlined_call_operand.vmem [shape: f32[1,32], index: 6, kind: input, shape index: {}]
  %s7 = inlined_call_operand.hbm [shape: f32[32,32], index: 7, kind: input, shape index: {}]
  %s8 = inlined_call_operand.vmem [shape: f32[1,32], index: 8, kind: input, shape index: {}]
  %s9 = inlined_call_operand.<no memory space> [shape: f32[1], index: 9, kind: input, shape index: {}]
  %s10 = inlined_call_operand.hbm [shape: f32[16,32], index: 10, kind: output, shape index: {}]
  %s11 = sld [smem:[#allocation0]]
  $region93: #{tpu_custom_call.1} parent=0
    _
  %s13 = ssub.s32 1, %s11
  %s14 = scalar_select 0, %s13, %s11
  %15 = sst [smem:[#allocation2]] %s9
  $region1: #{tpu_custom_call.1} parent=0
    #allocation3 [shape = 'u8[8192]{0}', space=vmem, size = 0x2000, scoped, tag = 'input window, operand 0']
    #allocation4 [shape = 's32[2]{0}', space=sflag, size = 0x8, scoped, tag = 'scoped memory for tpu_custom_call.1']
    #allocation5 [shape = 's32[2]{0}', space=sflag, size = 0x8, scoped, tag = 'scoped memory for tpu_custom_call.1']
    #allocation6 [shape = 'u8[8192]{0}', space=vmem, size = 0x2000, scoped, tag = 'input window, operand 1']
    #allocation7 [shape = 's32[2]{0}', space=sflag, size = 0x8, scoped, tag = 'scoped memory for tpu_custom_call.1']
    #allocation8 [shape = 'u8[8192]{0}', space=vmem, size = 0x2000, scoped, tag = 'input window, operand 2']
    #allocation9 [shape = 'u8[49152]{0}', space=vmem, size = 0xc000, scoped, tag = 'input window, operand 5, single buffered']
    #allocation10 [shape = 's32[1]{0}', space=sflag, size = 0x4, scoped, tag = 'scoped memory for tpu_custom_call.1']
    #allocation11 [shape = 'u8[16384]{0}', space=vmem, size = 0x4000, scoped, tag = 'input window, operand 7, single buffered']
    #allocation12 [shape = 'u8[8192]{0}', space=vmem, size = 0x2000, scoped, tag = 'output window, operand 0']
    %16 = vsyncpa [#allocation4], 0
    %s17 = scalar_lea.sflag [#allocation4], 1
    %18 = vsyncpa %s17, 0
    %19 = vsyncpa [#allocation7], 0
    %s20 = scalar_lea.sflag [#allocation7], 1
    %21 = vsyncpa %s20, 0
    %22 = vsyncpa [#allocation10], 0
    %23 = vsyncpa [#allocation5], 0
    %s24 = scalar_lea.sflag [#allocation5], 1
    %25 = vsyncpa %s24, 0
    loop: start=0, step=1, limit=4
    $region2: #{tpu_custom_call.1} parent=1 // loop_pre_header
      _
    $region3: #{tpu_custom_call.1} parent=1 // loop_header
      %s27 = sphi 0, %s31
      %p28 = scmp.ge.s32.totalorder %s27, 4
      %s37 = sphi 0, %s39
      %s40 = sphi 0, %s37
      %s41 = sphi 0, %s40
      %s57 = sphi 0, %s41
      %s63 = sphi 0, %s65
      %s66 = sphi 0, %s63
      %s67 = sphi 0, %s66
      %s83 = sphi 0, %s67
      %s89 = sphi 0, %s91
      %s92 = sphi 0, %s89
      %s93 = sphi 0, %s92
      %s109 = sphi 0, %s93
      %s113 = sphi 0, %s113
      %s115 = sphi 0, %s113
      %s116 = sphi 0, %s115
      %s130 = sphi 0, %s116
      %s134 = sphi 0, %s134
      %s136 = sphi 0, %s134
      %s137 = sphi 0, %s136
      %s151 = sphi 0, %s137
      %s155 = sphi 0, %s155
      %s157 = sphi 0, %s155
      %s158 = sphi 0, %s157
      %s172 = sphi 0, %s158
      %s176 = sphi 0, %s176
      %s178 = sphi 0, %s176
      %s179 = sphi 0, %s178
      %s193 = sphi 0, %s179
      %s197 = sphi 0, %s197
      %s199 = sphi 0, %s197
      %s200 = sphi 0, %s199
      %s214 = sphi 0, %s200
      %s218 = sphi 0, %s218
      %s220 = sphi 0, %s218
      %s221 = sphi 0, %s220
      %s235 = sphi 0, %s221
      %s239 = sphi 0, %s239
      %s241 = sphi 0, %s239
      %s242 = sphi 0, %s241
      %s256 = sphi 0, %s242
      %s262 = sphi 0, %s264
      %s265 = sphi 0, %s262
      %s266 = sphi 0, %s265
      %s282 = sphi 0, %s266
    $region4: #{tpu_custom_call.1} parent=1 // loop_header_branch
      %30 = sbr.rel (%p28) target = $region8
    $region5: #{tpu_custom_call.1} parent=1 // loop_body
      %s32 = ssub.s32 %s27, 1
      %s33 = ssub.s32 %s27, 2
      %s34 = sadd.s32 %s27, 1
      %s35 = ssub.s32 %s27, %s34
      %p36 = scmp.eq.s32.totalorder %s35, 0
      %s38 = sadd.s32 %s37, 1
      %s39 = scalar_select %p36, %s37, %s38
      %p42 = pneg %p36
      %p43 = scmp.eq.s32.totalorder %s27, 1
      %p44 = por %p42, %p43
      %p45 = scmp.ne.s32.totalorder %s37, %s40
      %p46 = scmp.eq.s32.totalorder %s27, 0
      %p47 = por %p45, %p46
      %p48 = scmp.ne.s32.totalorder %s37, %s40
      %p49 = scmp.eq.s32.totalorder %s32, 1
      %p50 = por %p48, %p49
      %p51 = scmp.ne.s32.totalorder %s40, %s41
      %p52 = scmp.eq.s32.totalorder %s32, 0
      %p53 = por %p51, %p52
      %p54 = scmp.ne.s32.totalorder %s40, %s41
      %p55 = scmp.eq.s32.totalorder %s33, 1
      %p56 = por %p54, %p55
      %p58 = scmp.ne.s32.totalorder %s41, %s57
      %p59 = scmp.eq.s32.totalorder %s33, 0
      %p60 = por %p58, %p59
      %s61 = ssub.s32 %s27, %s34
      %p62 = scmp.eq.s32.totalorder %s61, 0
      %s64 = sadd.s32 %s63, 1
      %s65 = scalar_select %p62, %s63, %s64
      %p68 = pneg %p62
      %p69 = scmp.eq.s32.totalorder %s27, 1
      %p70 = por %p68, %p69
      %p71 = scmp.ne.s32.totalorder %s63, %s66
      %p72 = scmp.eq.s32.totalorder %s27, 0
      %p73 = por %p71, %p72
      %p74 = scmp.ne.s32.totalorder %s63, %s66
      %p75 = scmp.eq.s32.totalorder %s32, 1
      %p76 = por %p74, %p75
      %p77 = scmp.ne.s32.totalorder %s66, %s67
      %p78 = scmp.eq.s32.totalorder %s32, 0
      %p79 = por %p77, %p78
      %p80 = scmp.ne.s32.totalorder %s66, %s67
      %p81 = scmp.eq.s32.totalorder %s33, 1
      %p82 = por %p80, %p81
      %p84 = scmp.ne.s32.totalorder %s67, %s83
      %p85 = scmp.eq.s32.totalorder %s33, 0
      %p86 = por %p84, %p85
      %s87 = ssub.s32 %s27, %s34
      %p88 = scmp.eq.s32.totalorder %s87, 0
      %s90 = sadd.s32 %s89, 1
      %s91 = scalar_select %p88, %s89, %s90
      %p94 = pneg %p88
      %p95 = scmp.eq.s32.totalorder %s27, 1
      %p96 = por %p94, %p95
      %p97 = scmp.ne.s32.totalorder %s89, %s92
      %p98 = scmp.eq.s32.totalorder %s27, 0
      %p99 = por %p97, %p98
      %p100 = scmp.ne.s32.totalorder %s89, %s92
      %p101 = scmp.eq.s32.totalorder %s32, 1
      %p102 = por %p100, %p101
      %p103 = scmp.ne.s32.totalorder %s92, %s93
      %p104 = scmp.eq.s32.totalorder %s32, 0
      %p105 = por %p103, %p104
      %p106 = scmp.ne.s32.totalorder %s92, %s93
      %p107 = scmp.eq.s32.totalorder %s33, 1
      %p108 = por %p106, %p107
      %p110 = scmp.ne.s32.totalorder %s93, %s109
      %p111 = scmp.eq.s32.totalorder %s33, 0
      %p112 = por %p110, %p111
      %s114 = sadd.s32 %s113, 1
      %p117 = scmp.eq.s32.totalorder %s27, 1
      %p118 = scmp.ne.s32.totalorder %s113, %s115
      %p119 = scmp.eq.s32.totalorder %s27, 0
      %p120 = por %p118, %p119
      %p121 = scmp.ne.s32.totalorder %s113, %s115
      %p122 = scmp.eq.s32.totalorder %s32, 1
      %p123 = por %p121, %p122
      %p124 = scmp.ne.s32.totalorder %s115, %s116
      %p125 = scmp.eq.s32.totalorder %s32, 0
      %p126 = por %p124, %p125
      %p127 = scmp.ne.s32.totalorder %s115, %s116
      %p128 = scmp.eq.s32.totalorder %s33, 1
      %p129 = por %p127, %p128
      %p131 = scmp.ne.s32.totalorder %s116, %s130
      %p132 = scmp.eq.s32.totalorder %s33, 0
      %p133 = por %p131, %p132
      %s135 = sadd.s32 %s134, 1
      %p138 = scmp.eq.s32.totalorder %s27, 1
      %p139 = scmp.ne.s32.totalorder %s134, %s136
      %p140 = scmp.eq.s32.totalorder %s27, 0
      %p141 = por %p139, %p140
      %p142 = scmp.ne.s32.totalorder %s134, %s136
      %p143 = scmp.eq.s32.totalorder %s32, 1
      %p144 = por %p142, %p143
      %p145 = scmp.ne.s32.totalorder %s136, %s137
      %p146 = scmp.eq.s32.totalorder %s32, 0
      %p147 = por %p145, %p146
      %p148 = scmp.ne.s32.totalorder %s136, %s137
      %p149 = scmp.eq.s32.totalorder %s33, 1
      %p150 = por %p148, %p149
      %p152 = scmp.ne.s32.totalorder %s137, %s151
      %p153 = scmp.eq.s32.totalorder %s33, 0
      %p154 = por %p152, %p153
      %s156 = sadd.s32 %s155, 1
      %p159 = scmp.eq.s32.totalorder %s27, 1
      %p160 = scmp.ne.s32.totalorder %s155, %s157
      %p161 = scmp.eq.s32.totalorder %s27, 0
      %p162 = por %p160, %p161
      %p163 = scmp.ne.s32.totalorder %s155, %s157
      %p164 = scmp.eq.s32.totalorder %s32, 1
      %p165 = por %p163, %p164
      %p166 = scmp.ne.s32.totalorder %s157, %s158
      %p167 = scmp.eq.s32.totalorder %s32, 0
      %p168 = por %p166, %p167
      %p169 = scmp.ne.s32.totalorder %s157, %s158
      %p170 = scmp.eq.s32.totalorder %s33, 1
      %p171 = por %p169, %p170
      %p173 = scmp.ne.s32.totalorder %s158, %s172
      %p174 = scmp.eq.s32.totalorder %s33, 0
      %p175 = por %p173, %p174
      %s177 = sadd.s32 %s176, 1
      %p180 = scmp.eq.s32.totalorder %s27, 1
      %p181 = scmp.ne.s32.totalorder %s176, %s178
      %p182 = scmp.eq.s32.totalorder %s27, 0
      %p183 = por %p181, %p182
      %p184 = scmp.ne.s32.totalorder %s176, %s178
      %p185 = scmp.eq.s32.totalorder %s32, 1
      %p186 = por %p184, %p185
      %p187 = scmp.ne.s32.totalorder %s178, %s179
      %p188 = scmp.eq.s32.totalorder %s32, 0
      %p189 = por %p187, %p188
      %p190 = scmp.ne.s32.totalorder %s178, %s179
      %p191 = scmp.eq.s32.totalorder %s33, 1
      %p192 = por %p190, %p191
      %p194 = scmp.ne.s32.totalorder %s179, %s193
      %p195 = scmp.eq.s32.totalorder %s33, 0
      %p196 = por %p194, %p195
      %s198 = sadd.s32 %s197, 1
      %p201 = scmp.eq.s32.totalorder %s27, 1
      %p202 = scmp.ne.s32.totalorder %s197, %s199
      %p203 = scmp.eq.s32.totalorder %s27, 0
      %p204 = por %p202, %p203
      %p205 = scmp.ne.s32.totalorder %s197, %s199
      %p206 = scmp.eq.s32.totalorder %s32, 1
      %p207 = por %p205, %p206
      %p208 = scmp.ne.s32.totalorder %s199, %s200
      %p209 = scmp.eq.s32.totalorder %s32, 0
      %p210 = por %p208, %p209
      %p211 = scmp.ne.s32.totalorder %s199, %s200
      %p212 = scmp.eq.s32.totalorder %s33, 1
      %p213 = por %p211, %p212
      %p215 = scmp.ne.s32.totalorder %s200, %s214
      %p216 = scmp.eq.s32.totalorder %s33, 0
      %p217 = por %p215, %p216
      %s219 = sadd.s32 %s218, 1
      %p222 = scmp.eq.s32.totalorder %s27, 1
      %p223 = scmp.ne.s32.totalorder %s218, %s220
      %p224 = scmp.eq.s32.totalorder %s27, 0
      %p225 = por %p223, %p224
      %p226 = scmp.ne.s32.totalorder %s218, %s220
      %p227 = scmp.eq.s32.totalorder %s32, 1
      %p228 = por %p226, %p227
      %p229 = scmp.ne.s32.totalorder %s220, %s221
      %p230 = scmp.eq.s32.totalorder %s32, 0
      %p231 = por %p229, %p230
      %p232 = scmp.ne.s32.totalorder %s220, %s221
      %p233 = scmp.eq.s32.totalorder %s33, 1
      %p234 = por %p232, %p233
      %p236 = scmp.ne.s32.totalorder %s221, %s235
      %p237 = scmp.eq.s32.totalorder %s33, 0
      %p238 = por %p236, %p237
      %s240 = sadd.s32 %s239, 1
      %p243 = scmp.eq.s32.totalorder %s27, 1
      %p244 = scmp.ne.s32.totalorder %s239, %s241
      %p245 = scmp.eq.s32.totalorder %s27, 0
      %p246 = por %p244, %p245
      %p247 = scmp.ne.s32.totalorder %s239, %s241
      %p248 = scmp.eq.s32.totalorder %s32, 1
      %p249 = por %p247, %p248
      %p250 = scmp.ne.s32.totalorder %s241, %s242
      %p251 = scmp.eq.s32.totalorder %s32, 0
      %p252 = por %p250, %p251
      %p253 = scmp.ne.s32.totalorder %s241, %s242
      %p254 = scmp.eq.s32.totalorder %s33, 1
      %p255 = por %p253, %p254
      %p257 = scmp.ne.s32.totalorder %s242, %s256
      %p258 = scmp.eq.s32.totalorder %s33, 0
      %p259 = por %p257, %p258
      %s260 = ssub.s32 %s27, %s34
      %p261 = scmp.eq.s32.totalorder %s260, 0
      %s263 = sadd.s32 %s262, 1
      %s264 = scalar_select %p261, %s262, %s263
      %p267 = pneg %p261
      %p268 = scmp.eq.s32.totalorder %s27, 1
      %p269 = por %p267, %p268
      %p270 = scmp.ne.s32.totalorder %s262, %s265
      %p271 = scmp.eq.s32.totalorder %s27, 0
      %p272 = por %p270, %p271
      %p273 = scmp.ne.s32.totalorder %s262, %s265
      %p274 = scmp.eq.s32.totalorder %s32, 1
      %p275 = por %p273, %p274
      %p276 = scmp.ne.s32.totalorder %s265, %s266
      %p277 = scmp.eq.s32.totalorder %s32, 0
      %p278 = por %p276, %p277
      %p279 = scmp.ne.s32.totalorder %s265, %s266
      %p280 = scmp.eq.s32.totalorder %s33, 1
      %p281 = por %p279, %p280
      %p283 = scmp.ne.s32.totalorder %s266, %s282
      %p284 = scmp.eq.s32.totalorder %s33, 0
      %p285 = por %p283, %p284
      %p286 = scmp.le.s32.totalorder 1, %s27
      %p287 = scmp.lt.s32.totalorder %s27, 3
      %p288 = pnand %p286, %p287
      %p289 = pneg %p288
      // Predicated region
      $region9: #{tpu_custom_call.1} parent=5 // pred_check
        _
      $region10: #{tpu_custom_call.1} parent=5 // pred_check_branch
        %291 = sbr.rel (%p288) target = $region12
      $region11: #{tpu_custom_call.1} parent=5 // pred_region
        %s292 = ssub.s32 %s27, 1
        // Predicated region
        $region13: #{tpu_custom_call.1} parent=11 // pred_check
          %p293 = pneg %p126
        $region14: #{tpu_custom_call.1} parent=11 // pred_check_branch
          %295 = sbr.rel (%p293) target = $region16
        $region15: #{tpu_custom_call.1} parent=11 // pred_region
          _
        $region16: #{tpu_custom_call.1} parent=11 // pred_fallthru
          _
        // Predicated region
        $region17: #{tpu_custom_call.1} parent=11 // pred_check
          %p296 = pneg %p147
        $region18: #{tpu_custom_call.1} parent=11 // pred_check_branch
          %298 = sbr.rel (%p296) target = $region20
        $region19: #{tpu_custom_call.1} parent=11 // pred_region
          _
        $region20: #{tpu_custom_call.1} parent=11 // pred_fallthru
          _
        // Predicated region
        $region21: #{tpu_custom_call.1} parent=11 // pred_check
          %p299 = pneg %p168
        $region22: #{tpu_custom_call.1} parent=11 // pred_check_branch
          %301 = sbr.rel (%p299) target = $region24
        $region23: #{tpu_custom_call.1} parent=11 // pred_region
          %s303 = ssub.s32 1536, 1536
          %304 = vsyncadd [#allocation10], %s303
          %s305 = sshll.u32 [#allocation9], 4
          %s306 = int_to_ptr.vmem [resolvable:$true] %s305
          %311 = dma.hbm_to_vmem [thread:$0]  %s5, 1536, %s306, [#allocation10], 128, 128, 8
        $region24: #{tpu_custom_call.1} parent=11 // pred_fallthru
          _
        // Predicated region
        $region25: #{tpu_custom_call.1} parent=11 // pred_check
          %p312 = pneg %p189
        $region26: #{tpu_custom_call.1} parent=11 // pred_check_branch
          %314 = sbr.rel (%p312) target = $region28
        $region27: #{tpu_custom_call.1} parent=11 // pred_region
          _
        $region28: #{tpu_custom_call.1} parent=11 // pred_fallthru
          _
        // Predicated region
        $region29: #{tpu_custom_call.1} parent=11 // pred_check
          %p315 = pneg %p210
        $region30: #{tpu_custom_call.1} parent=11 // pred_check_branch
          %317 = sbr.rel (%p315) target = $region32
        $region31: #{tpu_custom_call.1} parent=11 // pred_region
          %s319 = ssub.s32 512, 512
          %320 = vsyncadd [#allocation10], %s319
          %s321 = sshll.u32 [#allocation11], 4
          %s322 = int_to_ptr.vmem [resolvable:$true] %s321
          %327 = dma.hbm_to_vmem [thread:$0]  %s7, 512, %s322, [#allocation10], 128, 128, 8
        $region32: #{tpu_custom_call.1} parent=11 // pred_fallthru
          _
        // Predicated region
        $region33: #{tpu_custom_call.1} parent=11 // pred_check
          %p328 = pneg %p231
        $region34: #{tpu_custom_call.1} parent=11 // pred_check_branch
          %330 = sbr.rel (%p328) target = $region36
        $region35: #{tpu_custom_call.1} parent=11 // pred_region
          _
        $region36: #{tpu_custom_call.1} parent=11 // pred_fallthru
          _
        // Predicated region
        $region37: #{tpu_custom_call.1} parent=11 // pred_check
          %p331 = pneg %p252
        $region38: #{tpu_custom_call.1} parent=11 // pred_check_branch
          %333 = sbr.rel (%p331) target = $region40
        $region39: #{tpu_custom_call.1} parent=11 // pred_region
          _
        $region40: #{tpu_custom_call.1} parent=11 // pred_fallthru
          _
      $region12: #{tpu_custom_call.1} parent=5 // pred_fallthru
        _
      %p334 = scmp.lt.s32.totalorder %s27, 2
      // Predicated region
      $region41: #{tpu_custom_call.1} parent=5 // pred_check
        %p335 = pneg %p334
      $region42: #{tpu_custom_call.1} parent=5 // pred_check_branch
        %337 = sbr.rel (%p335) target = $region44
      $region43: #{tpu_custom_call.1} parent=5 // pred_region
        // Predicated region
        $region45: #{tpu_custom_call.1} parent=43 // pred_check
          %p338 = pneg %p47
        $region46: #{tpu_custom_call.1} parent=43 // pred_check_branch
          %340 = sbr.rel (%p338) target = $region48
        $region47: #{tpu_custom_call.1} parent=43 // pred_region
          %s341 = sand.u32 %s37, 1
          %s342 = scalar_lea.sflag [#allocation4], %s341
          %s343 = sand.u32 %s37, 1
          %s344 = smul.addr %s343, 8
          %s345 = scalar_lea.vmem [#allocation3], %s344
          %s347 = ssub.s32 128, 128
          %348 = vsyncadd %s342, %s347
          %s349 = smul.addr %s27, 128
          %s350 = scalar_lea.hbm %s0, %s349
          %s352 = sshll.u32 %s345, 4
          %s353 = int_to_ptr.vmem [resolvable:$true] %s352
          %355 = dma.hbm_to_vmem [thread:$0]  %s350, 128, %s353, %s342
        $region48: #{tpu_custom_call.1} parent=43 // pred_fallthru
          _
        // Predicated region
        $region49: #{tpu_custom_call.1} parent=43 // pred_check
          %p356 = pneg %p73
        $region50: #{tpu_custom_call.1} parent=43 // pred_check_branch
          %358 = sbr.rel (%p356) target = $region52
        $region51: #{tpu_custom_call.1} parent=43 // pred_region
          %s359 = sand.u32 %s27, 1
          %s360 = scalar_lea.sflag [#allocation7], %s359
          %s361 = sand.u32 %s63, 1
          %s362 = smul.addr %s361, 8
          %s363 = scalar_lea.vmem [#allocation6], %s362
          %s365 = ssub.s32 128, 128
          %366 = vsyncadd %s360, %s365
          %s367 = smul.addr %s27, 128
          %s368 = scalar_lea.hbm %s1, %s367
          %s370 = sshll.u32 %s363, 4
          %s371 = int_to_ptr.vmem [resolvable:$true] %s370
          %373 = dma.hbm_to_vmem [thread:$0]  %s368, 128, %s371, %s360
        $region52: #{tpu_custom_call.1} parent=43 // pred_fallthru
          _
        // Predicated region
        $region53: #{tpu_custom_call.1} parent=43 // pred_check
          %p374 = pneg %p99
        $region54: #{tpu_custom_call.1} parent=43 // pred_check_branch
          %376 = sbr.rel (%p374) target = $region56
        $region55: #{tpu_custom_call.1} parent=43 // pred_region
          %s377 = sand.u32 %s27, 1
          %s378 = scalar_lea.sflag [#allocation7], %s377
          %s379 = sand.u32 %s89, 1
          %s380 = smul.addr %s379, 8
          %s381 = scalar_lea.vmem [#allocation8], %s380
          %s383 = ssub.s32 128, 128
          %384 = vsyncadd %s378, %s383
          %s385 = smul.addr %s27, 128
          %s386 = scalar_lea.hbm %s2, %s385
          %s388 = sshll.u32 %s381, 4
          %s389 = int_to_ptr.vmem [resolvable:$true] %s388
          %391 = dma.hbm_to_vmem [thread:$0]  %s386, 128, %s389, %s378
        $region56: #{tpu_custom_call.1} parent=43 // pred_fallthru
          _
      $region44: #{tpu_custom_call.1} parent=5 // pred_fallthru
        _
      %p392 = scmp.le.s32.totalorder 1, %s27
      %p393 = scmp.lt.s32.totalorder %s27, 3
      %p394 = pnand %p392, %p393
      %p395 = pneg %p394
      // Predicated region
      $region57: #{tpu_custom_call.1} parent=5 // pred_check
        _
      $region58: #{tpu_custom_call.1} parent=5 // pred_check_branch
        %397 = sbr.rel (%p394) target = $region60
      $region59: #{tpu_custom_call.1} parent=5 // pred_region
        %s398 = ssub.s32 %s27, 1
        %s399 = sand.u32 %s40, 1
        %s400 = scalar_lea.sflag [#allocation4], %s399
        %s401 = sand.u32 %s40, 1
        %s402 = smul.addr %s401, 8
        %s403 = scalar_lea.vmem [#allocation3], %s402
        // Predicated region
        $region61: #{tpu_custom_call.1} parent=59 // pred_check
          %p404 = pneg %p53
        $region62: #{tpu_custom_call.1} parent=59 // pred_check_branch
          %406 = sbr.rel (%p404) target = $region64
        $region63: #{tpu_custom_call.1} parent=59 // pred_region
          %407 = dma.done %s400, 128
        $region64: #{tpu_custom_call.1} parent=59 // pred_fallthru
          _
        %s408 = sand.u32 %s32, 1
        %s409 = scalar_lea.sflag [#allocation7], %s408
        %s410 = sand.u32 %s66, 1
        %s411 = smul.addr %s410, 8
        %s412 = scalar_lea.vmem [#allocation6], %s411
        // Predicated region
        $region65: #{tpu_custom_call.1} parent=59 // pred_check
          %p413 = pneg %p79
        $region66: #{tpu_custom_call.1} parent=59 // pred_check_branch
          %415 = sbr.rel (%p413) target = $region68
        $region67: #{tpu_custom_call.1} parent=59 // pred_region
          %416 = dma.done %s409, 128
        $region68: #{tpu_custom_call.1} parent=59 // pred_fallthru
          _
        %s417 = sand.u32 %s32, 1
        %s418 = scalar_lea.sflag [#allocation7], %s417
        %s419 = sand.u32 %s92, 1
        %s420 = smul.addr %s419, 8
        %s421 = scalar_lea.vmem [#allocation8], %s420
        // Predicated region
        $region69: #{tpu_custom_call.1} parent=59 // pred_check
          %p422 = pneg %p105
        $region70: #{tpu_custom_call.1} parent=59 // pred_check_branch
          %424 = sbr.rel (%p422) target = $region72
        $region71: #{tpu_custom_call.1} parent=59 // pred_region
          %425 = dma.done %s418, 128
        $region72: #{tpu_custom_call.1} parent=59 // pred_fallthru
          _
        // Predicated region
        $region73: #{tpu_custom_call.1} parent=59 // pred_check
          %p426 = pneg %p168
        $region74: #{tpu_custom_call.1} parent=59 // pred_check_branch
          %428 = sbr.rel (%p426) target = $region76
        $region75: #{tpu_custom_call.1} parent=59 // pred_region
          %429 = dma.done [#allocation10], 1536
        $region76: #{tpu_custom_call.1} parent=59 // pred_fallthru
          _
        // Predicated region
        $region77: #{tpu_custom_call.1} parent=59 // pred_check
          %p430 = pneg %p210
        $region78: #{tpu_custom_call.1} parent=59 // pred_check_branch
          %432 = sbr.rel (%p430) target = $region80
        $region79: #{tpu_custom_call.1} parent=59 // pred_region
          %433 = dma.done [#allocation10], 512
        $region80: #{tpu_custom_call.1} parent=59 // pred_fallthru
          _
        %s434 = sand.u32 %s40, 1
        %s435 = scalar_lea.sflag [#allocation4], %s434
        %s436 = sand.u32 %s40, 1
        %s437 = smul.addr %s436, 8
        %s438 = scalar_lea.vmem [#allocation3], %s437
        %p439 = pneg %p53
        %p440 = pneg %p50
        %s441 = sand.u32 %s32, 1
        %s442 = scalar_lea.sflag [#allocation7], %s441
        %s443 = sand.u32 %s66, 1
        %s444 = smul.addr %s443, 8
        %s445 = scalar_lea.vmem [#allocation6], %s444
        %p446 = pneg %p79
        %p447 = pneg %p76
        %s448 = sand.u32 %s32, 1
        %s449 = scalar_lea.sflag [#allocation7], %s448
        %s450 = sand.u32 %s92, 1
        %s451 = smul.addr %s450, 8
        %s452 = scalar_lea.vmem [#allocation8], %s451
        %p453 = pneg %p105
        %p454 = pneg %p102
        %p455 = pneg %p126
        %p456 = pneg %p123
        %p457 = pneg %p147
        %p458 = pneg %p144
        %p459 = pneg %p168
        %p460 = pneg %p165
        %p461 = pneg %p189
        %p462 = pneg %p186
        %p463 = pneg %p210
        %p464 = pneg %p207
        %p465 = pneg %p231
        %p466 = pneg %p228
        %p467 = pneg %p252
        %p468 = pneg %p249
        %p469 = pneg %p278
        %p470 = pneg %p275
        %s471 = sand.u32 %s265, 1
        %s472 = scalar_lea.sflag [#allocation5], %s471
        %s473 = sand.u32 %s265, 1
        %s474 = smul.addr %s473, 8
        %s475 = scalar_lea.vmem [#allocation12], %s474
        %v476 = vld [vmem:[%s3] sm:$0x1]
        %v477 = vld [vmem:[%s4] sm:$0x1]
        %v478 = vld [vmem:[%s403] sm:$0xff]
        %vm479 = vcmask 261120
        %v480 = vsel %vm479, %v478, 0.0
        %481 = vadd.xlane.f32.xlu0 %v480
        %v482 = vpop.xlane.xlu0 %481
        %v483 = vmul.f32 %v482, 0.03125
        %v484 = vmul.f32 %v478, %v478
        %v485 = vsel %vm479, %v484, 0.0
        %486 = vadd.xlane.f32.xlu0 %v485
        %v487 = vpop.xlane.xlu0 %486
        %v488 = vmul.f32 %v487, 0.03125
        %v489 = vmul.f32 %v483, %v483
        %v490 = vsub.f32 %v488, %v489
        %v491 = vsub.f32 %v478, %v483
        %v492 = vadd.f32 %v490, 1e-05
        %v493 = vrsqrt.pop %v492
        %v494 = vmul.f32 %v491, %v493
        %v496 = vlaneseq
        %v497 = vshrl.u32 %v496, 7
        %v498 = vsub.s32 0, %v497
        %v499 = vrot.slane %v476, %v498
        %v501 = vmul.f32 %v494, %v499
        %v503 = vlaneseq
        %v504 = vshrl.u32 %v503, 7
        %v505 = vsub.s32 0, %v504
        %v506 = vrot.slane %v477, %v505
        %v508 = vadd.f32 %v501, %v506
        %v509 = vld [vmem:[#allocation9] sm:$0xff]
        %v510 = vld [vmem:[#allocation9 + $0x8] sm:$0xff]
        %v511 = vld [vmem:[#allocation9 + $0x10] sm:$0xff]
        %v512 = vld [vmem:[#allocation9 + $0x18] sm:$0xff]
        %v513 = vld [vmem:[%s412] sm:$0xff]
        %v514 = vsel %vm479, %v513, 0.0
        %515 = vadd.xlane.f32.xlu0 %v514
        %v516 = vpop.xlane.xlu0 %515
        %v517 = vmul.f32 %v516, 0.03125
        %v518 = vmul.f32 %v513, %v513
        %v519 = vsel %vm479, %v518, 0.0
        %520 = vadd.xlane.f32.xlu0 %v519
        %v521 = vpop.xlane.xlu0 %520
        %v522 = vmul.f32 %v521, 0.03125
        %v523 = vmul.f32 %v517, %v517
        %v524 = vsub.f32 %v522, %v523
        %v525 = vsub.f32 %v513, %v517
        %v526 = vadd.f32 %v524, 1e-05
        %v527 = vrsqrt.pop %v526
        %v528 = vmul.f32 %v525, %v527
        %v529 = vmul.f32 %v528, %v499
        %v530 = vadd.f32 %v529, %v506
        %s531 = scalar_lea.vmem [#allocation9], 32
        %v532 = vld [vmem:[%s531] sm:$0xff]
        %v533 = vld [vmem:[%s531 + $0x8] sm:$0xff]
        %v534 = vld [vmem:[%s531 + $0x10] sm:$0xff]
        %v535 = vld [vmem:[%s531 + $0x18] sm:$0xff]
        %v537 = vsel %vm479, %v530, 0
        %539 = vmatprep.subr.mxu0 0.0
        %540 = vmatpush1.msra.mxu0 %v532
        %541 = vmatprep.subr.mxu0 0.0
        %542 = vmatpush1.msra.mxu0 %v533
        %543 = vmatprep.subr.mxu0 0.0
        %544 = vmatpush1.msra.mxu0 %v534
        %545 = vmatprep.subr.mxu0 0.0
        %546 = vmatpush1.msra.mxu0 %v535
        %547 = vmatprep.subr.mxu0 0.0
        %548 = vmatpush1.msra.mxu0 0.0
        %549 = vmatprep.subr.mxu0 0.0
        %550 = vmatpush1.msra.mxu0 0.0
        %551 = vmatprep.subr.mxu0 0.0
        %552 = vmatpush1.msra.mxu0 0.0
        %553 = vmatprep.subr.mxu0 0.0
        %554 = vmatpush1.msra.mxu0 0.0
        %555 = vmatprep.subr.mxu0 0.0
        %556 = vmatpush1.msra.mxu0 0.0
        %557 = vmatprep.subr.mxu0 0.0
        %558 = vmatpush1.msra.mxu0 0.0
        %559 = vmatprep.subr.mxu0 0.0
        %560 = vmatpush1.msra.mxu0 0.0
        %561 = vmatprep.subr.mxu0 0.0
        %562 = vmatpush1.msra.mxu0 0.0
        %563 = vmatprep.subr.mxu0 0.0
        %564 = vmatpush1.msra.mxu0 0.0
        %565 = vmatprep.subr.mxu0 0.0
        %566 = vmatpush1.msra.mxu0 0.0
        %567 = vmatprep.subr.mxu0 0.0
        %568 = vmatpush1.msra.mxu0 0.0
        %569 = vmatprep.subr.mxu0 0.0
        %570 = vmatpush1.msra.mxu0 0.0
        %571 = vmatprep.subr.mxu0 0.0
        %572 = vmatpush1.msra.mxu0 0.0
        %573 = vmatprep.subr.mxu0 0.0
        %574 = vmatpush1.msra.mxu0 0.0
        %575 = vmatprep.subr.mxu0 0.0
        %576 = vmatpush1.msra.mxu0 0.0
        %577 = vmatprep.subr.mxu0 0.0
        %578 = vmatpush1.msra.mxu0 0.0
        %579 = vmatprep.subr.mxu0 0.0
        %580 = vmatpush1.msra.mxu0 0.0
        %581 = vmatprep.subr.mxu0 0.0
        %582 = vmatpush1.msra.mxu0 0.0
        %583 = vmatprep.subr.mxu0 0.0
        %584 = vmatpush1.msra.mxu0 0.0
        %585 = vmatprep.subr.mxu0 0.0
        %586 = vmatpush1.msra.mxu0 0.0
        %587 = vmatprep.subr.mxu0 0.0
        %588 = vmatpush1.msra.mxu0 0.0
        %589 = vmatprep.subr.mxu0 0.0
        %590 = vmatpush1.msra.mxu0 0.0
        %591 = vmatprep.subr.mxu0 0.0
        %592 = vmatpush1.msra.mxu0 0.0
        %593 = vmatprep.subr.mxu0 0.0
        %594 = vmatpush1.msra.mxu0 0.0
        %595 = vmatprep.subr.mxu0 0.0
        %596 = vmatpush1.msra.mxu0 0.0
        %597 = vmatprep.subr.mxu0 0.0
        %598 = vmatpush1.msra.mxu0 0.0
        %599 = vmatprep.subr.mxu0 0.0
        %600 = vmatpush1.msra.mxu0 0.0
        %601 = vmatprep.subr.mxu0 0.0
        %602 = vmatpush1.msra.mxu0 0.0
        %603 = vmatprep.mubr.f32.mxu0 0.0
        %604 = vmatmul.mubr.f32.gmra.mrb[0].mxu0 %v537
        %v605 = vpop.f32.mrb[0].mxu0
        %v606 = vadd.f32 0.0, %v605
        %v607 = vpop.f32.mrb[0].mxu0
        %608 = vdwg.mxu0
        %v610 = vsel %vm479, %v508, 0
        %612 = vmatprep.subr.mxu0 0.0
        %613 = vmatpush1.msra.mxu0 %v509
        %614 = vmatprep.subr.mxu0 0.0
        %615 = vmatpush1.msra.mxu0 %v510
        %616 = vmatprep.subr.mxu0 0.0
        %617 = vmatpush1.msra.mxu0 %v511
        %618 = vmatprep.subr.mxu0 0.0
        %619 = vmatpush1.msra.mxu0 %v512
        %620 = vmatprep.subr.mxu0 0.0
        %621 = vmatpush1.msra.mxu0 0.0
        %622 = vmatprep.subr.mxu0 0.0
        %623 = vmatpush1.msra.mxu0 0.0
        %624 = vmatprep.subr.mxu0 0.0
        %625 = vmatpush1.msra.mxu0 0.0
        %626 = vmatprep.subr.mxu0 0.0
        %627 = vmatpush1.msra.mxu0 0.0
        %628 = vmatprep.subr.mxu0 0.0
        %629 = vmatpush1.msra.mxu0 0.0
        %630 = vmatprep.subr.mxu0 0.0
        %631 = vmatpush1.msra.mxu0 0.0
        %632 = vmatprep.subr.mxu0 0.0
        %633 = vmatpush1.msra.mxu0 0.0
        %634 = vmatprep.subr.mxu0 0.0
        %635 = vmatpush1.msra.mxu0 0.0
        %636 = vmatprep.subr.mxu0 0.0
        %637 = vmatpush1.msra.mxu0 0.0
        %638 = vmatprep.subr.mxu0 0.0
        %639 = vmatpush1.msra.mxu0 0.0
        %640 = vmatprep.subr.mxu0 0.0
        %641 = vmatpush1.msra.mxu0 0.0
        %642 = vmatprep.subr.mxu0 0.0
        %643 = vmatpush1.msra.mxu0 0.0
        %644 = vmatprep.subr.mxu0 0.0
        %645 = vmatpush1.msra.mxu0 0.0
        %646 = vmatprep.subr.mxu0 0.0
        %647 = vmatpush1.msra.mxu0 0.0
        %648 = vmatprep.subr.mxu0 0.0
        %649 = vmatpush1.msra.mxu0 0.0
        %650 = vmatprep.subr.mxu0 0.0
        %651 = vmatpush1.msra.mxu0 0.0
        %652 = vmatprep.subr.mxu0 0.0
        %653 = vmatpush1.msra.mxu0 0.0
        %654 = vmatprep.subr.mxu0 0.0
        %655 = vmatpush1.msra.mxu0 0.0
        %656 = vmatprep.subr.mxu0 0.0
        %657 = vmatpush1.msra.mxu0 0.0
        %658 = vmatprep.subr.mxu0 0.0
        %659 = vmatpush1.msra.mxu0 0.0
        %660 = vmatprep.subr.mxu0 0.0
        %661 = vmatpush1.msra.mxu0 0.0
        %662 = vmatprep.subr.mxu0 0.0
        %663 = vmatpush1.msra.mxu0 0.0
        %664 = vmatprep.subr.mxu0 0.0
        %665 = vmatpush1.msra.mxu0 0.0
        %666 = vmatprep.subr.mxu0 0.0
        %667 = vmatpush1.msra.mxu0 0.0
        %668 = vmatprep.subr.mxu0 0.0
        %669 = vmatpush1.msra.mxu0 0.0
        %670 = vmatprep.subr.mxu0 0.0
        %671 = vmatpush1.msra.mxu0 0.0
        %672 = vmatprep.subr.mxu0 0.0
        %673 = vmatpush1.msra.mxu0 0.0
        %674 = vmatprep.subr.mxu0 0.0
        %675 = vmatpush1.msra.mxu0 0.0
        %676 = vmatprep.mubr.f32.mxu0 0.0
        %677 = vmatmul.mubr.f32.gmra.mrb[0].mxu0 %v610
        %v678 = vpop.f32.mrb[0].mxu0
        %v679 = vadd.f32 %v606, %v678
        %v680 = vpop.f32.mrb[0].mxu0
        %681 = vdwg.mxu0
        %v682 = vld [vmem:[%s421] sm:$0xff]
        %v683 = vsel %vm479, %v682, 0.0
        %684 = vadd.xlane.f32.xlu0 %v683
        %v685 = vpop.xlane.xlu0 %684
        %v686 = vmul.f32 %v685, 0.03125
        %v687 = vmul.f32 %v682, %v682
        %v688 = vsel %vm479, %v687, 0.0
        %689 = vadd.xlane.f32.xlu0 %v688
        %v690 = vpop.xlane.xlu0 %689
        %v691 = vmul.f32 %v690, 0.03125
        %v692 = vmul.f32 %v686, %v686
        %v693 = vsub.f32 %v691, %v692
        %v694 = vsub.f32 %v682, %v686
        %v695 = vadd.f32 %v693, 1e-05
        %v696 = vrsqrt.pop %v695
        %v697 = vmul.f32 %v694, %v696
        %v698 = vmul.f32 %v697, %v499
        %v699 = vadd.f32 %v698, %v506
        %s700 = scalar_lea.vmem [#allocation9], 64
        %v701 = vld [vmem:[%s700] sm:$0xff]
        %v702 = vld [vmem:[%s700 + $0x8] sm:$0xff]
        %v703 = vld [vmem:[%s700 + $0x10] sm:$0xff]
        %v704 = vld [vmem:[%s700 + $0x18] sm:$0xff]
        %v706 = vsel %vm479, %v699, 0
        %708 = vmatprep.subr.mxu0 0.0
        %709 = vmatpush1.msra.mxu0 %v701
        %710 = vmatprep.subr.mxu0 0.0
        %711 = vmatpush1.msra.mxu0 %v702
        %712 = vmatprep.subr.mxu0 0.0
        %713 = vmatpush1.msra.mxu0 %v703
        %714 = vmatprep.subr.mxu0 0.0
        %715 = vmatpush1.msra.mxu0 %v704
        %716 = vmatprep.subr.mxu0 0.0
        %717 = vmatpush1.msra.mxu0 0.0
        %718 = vmatprep.subr.mxu0 0.0
        %719 = vmatpush1.msra.mxu0 0.0
        %720 = vmatprep.subr.mxu0 0.0
        %721 = vmatpush1.msra.mxu0 0.0
        %722 = vmatprep.subr.mxu0 0.0
        %723 = vmatpush1.msra.mxu0 0.0
        %724 = vmatprep.subr.mxu0 0.0
        %725 = vmatpush1.msra.mxu0 0.0
        %726 = vmatprep.subr.mxu0 0.0
        %727 = vmatpush1.msra.mxu0 0.0
        %728 = vmatprep.subr.mxu0 0.0
        %729 = vmatpush1.msra.mxu0 0.0
        %730 = vmatprep.subr.mxu0 0.0
        %731 = vmatpush1.msra.mxu0 0.0
        %732 = vmatprep.subr.mxu0 0.0
        %733 = vmatpush1.msra.mxu0 0.0
        %734 = vmatprep.subr.mxu0 0.0
        %735 = vmatpush1.msra.mxu0 0.0
        %736 = vmatprep.subr.mxu0 0.0
        %737 = vmatpush1.msra.mxu0 0.0
        %738 = vmatprep.subr.mxu0 0.0
        %739 = vmatpush1.msra.mxu0 0.0
        %740 = vmatprep.subr.mxu0 0.0
        %741 = vmatpush1.msra.mxu0 0.0
        %742 = vmatprep.subr.mxu0 0.0
        %743 = vmatpush1.msra.mxu0 0.0
        %744 = vmatprep.subr.mxu0 0.0
        %745 = vmatpush1.msra.mxu0 0.0
        %746 = vmatprep.subr.mxu0 0.0
        %747 = vmatpush1.msra.mxu0 0.0
        %748 = vmatprep.subr.mxu0 0.0
        %749 = vmatpush1.msra.mxu0 0.0
        %750 = vmatprep.subr.mxu0 0.0
        %751 = vmatpush1.msra.mxu0 0.0
        %752 = vmatprep.subr.mxu0 0.0
        %753 = vmatpush1.msra.mxu0 0.0
        %754 = vmatprep.subr.mxu0 0.0
        %755 = vmatpush1.msra.mxu0 0.0
        %756 = vmatprep.subr.mxu0 0.0
        %757 = vmatpush1.msra.mxu0 0.0
        %758 = vmatprep.subr.mxu0 0.0
        %759 = vmatpush1.msra.mxu0 0.0
        %760 = vmatprep.subr.mxu0 0.0
        %761 = vmatpush1.msra.mxu0 0.0
        %762 = vmatprep.subr.mxu0 0.0
        %763 = vmatpush1.msra.mxu0 0.0
        %764 = vmatprep.subr.mxu0 0.0
        %765 = vmatpush1.msra.mxu0 0.0
        %766 = vmatprep.subr.mxu0 0.0
        %767 = vmatpush1.msra.mxu0 0.0
        %768 = vmatprep.subr.mxu0 0.0
        %769 = vmatpush1.msra.mxu0 0.0
        %770 = vmatprep.subr.mxu0 0.0
        %771 = vmatpush1.msra.mxu0 0.0
        %772 = vmatprep.mubr.f32.mxu0 0.0
        %773 = vmatmul.mubr.f32.gmra.mrb[0].mxu0 %v706
        %v774 = vpop.f32.mrb[0].mxu0
        %v775 = vadd.f32 0.0, %v774
        %v776 = vpop.f32.mrb[0].mxu0
        %777 = vdwg.mxu0
        %v778 = vadd.f32 %v679, %v775
        %v779 = vld [vmem:[%s6] sm:$0x1]
        %v781 = vlaneseq
        %v782 = vshrl.u32 %v781, 7
        %v783 = vsub.s32 0, %v782
        %v784 = vrot.slane %v779, %v783
        %v786 = vadd.f32 %v778, %v784
        %v787 = vmul.f32 %v786, 0.5
        %v788 = vmul.f32 %v786, 0.70710677
        %v789 = verf.f32.pop %v788
        %v790 = vadd.f32 %v789, 1.0
        %v791 = vmul.f32 %v787, %v790
        %v792 = vld [vmem:[#allocation11] sm:$0xff]
        %v793 = vld [vmem:[#allocation11 + $0x8] sm:$0xff]
        %v794 = vld [vmem:[#allocation11 + $0x10] sm:$0xff]
        %v795 = vld [vmem:[#allocation11 + $0x18] sm:$0xff]
        %v796 = vld [vmem:[%s8] sm:$0x1]
        %v798 = vlaneseq
        %v799 = vshrl.u32 %v798, 7
        %v800 = vsub.s32 0, %v799
        %v801 = vrot.slane %v796, %v800
        %v804 = vsel %vm479, %v791, 0
        %806 = vmatprep.subr.mxu0 0.0
        %807 = vmatpush1.msra.mxu0 %v792
        %808 = vmatprep.subr.mxu0 0.0
        %809 = vmatpush1.msra.mxu0 %v793
        %810 = vmatprep.subr.mxu0 0.0
        %811 = vmatpush1.msra.mxu0 %v794
        %812 = vmatprep.subr.mxu0 0.0
        %813 = vmatpush1.msra.mxu0 %v795
        %814 = vmatprep.subr.mxu0 0.0
        %815 = vmatpush1.msra.mxu0 0.0
        %816 = vmatprep.subr.mxu0 0.0
        %817 = vmatpush1.msra.mxu0 0.0
        %818 = vmatprep.subr.mxu0 0.0
        %819 = vmatpush1.msra.mxu0 0.0
        %820 = vmatprep.subr.mxu0 0.0
        %821 = vmatpush1.msra.mxu0 0.0
        %822 = vmatprep.subr.mxu0 0.0
        %823 = vmatpush1.msra.mxu0 0.0
        %824 = vmatprep.subr.mxu0 0.0
        %825 = vmatpush1.msra.mxu0 0.0
        %826 = vmatprep.subr.mxu0 0.0
        %827 = vmatpush1.msra.mxu0 0.0
        %828 = vmatprep.subr.mxu0 0.0
        %829 = vmatpush1.msra.mxu0 0.0
        %830 = vmatprep.subr.mxu0 0.0
        %831 = vmatpush1.msra.mxu0 0.0
        %832 = vmatprep.subr.mxu0 0.0
        %833 = vmatpush1.msra.mxu0 0.0
        %834 = vmatprep.subr.mxu0 0.0
        %835 = vmatpush1.msra.mxu0 0.0
        %836 = vmatprep.subr.mxu0 0.0
        %837 = vmatpush1.msra.mxu0 0.0
        %838 = vmatprep.subr.mxu0 0.0
        %839 = vmatpush1.msra.mxu0 0.0
        %840 = vmatprep.subr.mxu0 0.0
        %841 = vmatpush1.msra.mxu0 0.0
        %842 = vmatprep.subr.mxu0 0.0
        %843 = vmatpush1.msra.mxu0 0.0
        %844 = vmatprep.subr.mxu0 0.0
        %845 = vmatpush1.msra.mxu0 0.0
        %846 = vmatprep.subr.mxu0 0.0
        %847 = vmatpush1.msra.mxu0 0.0
        %848 = vmatprep.subr.mxu0 0.0
        %849 = vmatpush1.msra.mxu0 0.0
        %850 = vmatprep.subr.mxu0 0.0
        %851 = vmatpush1.msra.mxu0 0.0
        %852 = vmatprep.subr.mxu0 0.0
        %853 = vmatpush1.msra.mxu0 0.0
        %854 = vmatprep.subr.mxu0 0.0
        %855 = vmatpush1.msra.mxu0 0.0
        %856 = vmatprep.subr.mxu0 0.0
        %857 = vmatpush1.msra.mxu0 0.0
        %858 = vmatprep.subr.mxu0 0.0
        %859 = vmatpush1.msra.mxu0 0.0
        %860 = vmatprep.subr.mxu0 0.0
        %861 = vmatpush1.msra.mxu0 0.0
        %862 = vmatprep.subr.mxu0 0.0
        %863 = vmatpush1.msra.mxu0 0.0
        %864 = vmatprep.subr.mxu0 0.0
        %865 = vmatpush1.msra.mxu0 0.0
        %866 = vmatprep.subr.mxu0 0.0
        %867 = vmatpush1.msra.mxu0 0.0
        %868 = vmatprep.subr.mxu0 0.0
        %869 = vmatpush1.msra.mxu0 0.0
        %870 = vmatprep.mubr.f32.mxu0 0.0
        %871 = vmatmul.mubr.f32.gmra.mrb[0].mxu0 %v804
        %v872 = vpop.f32.mrb[0].mxu0
        %v873 = vadd.f32 %v801, %v872
        %v874 = vpop.f32.mrb[0].mxu0
        %875 = vdwg.mxu0
        %s876 = sld [smem:[#allocation2]]
        %v877 = vstv %s876
        %v878 = vmul.f32 %v877, %v478
        %v879 = vadd.f32 %v873, %v878
        %880 = vst.msk [vmem:[%s475] sm:$0xff] %vm479, %v879
        %s881 = sand.u32 %s265, 1
        %s882 = scalar_lea.sflag [#allocation5], %s881
        %s883 = sand.u32 %s265, 1
        %s884 = smul.addr %s883, 8
        %s885 = scalar_lea.vmem [#allocation12], %s884
        // Predicated region
        $region81: #{tpu_custom_call.1} parent=59 // pred_check
          %p886 = pneg %p275
        $region82: #{tpu_custom_call.1} parent=59 // pred_check_branch
          %888 = sbr.rel (%p886) target = $region84
        $region83: #{tpu_custom_call.1} parent=59 // pred_region
          %s890 = ssub.s32 128, 128
          %891 = vsyncadd %s882, %s890
          %s892 = smul.addr %s32, 128
          %s893 = scalar_lea.hbm %s10, %s892
          %s895 = sshll.u32 %s885, 4
          %s896 = int_to_ptr.vmem [resolvable:$true] %s895
          %898 = dma.vmem_to_hbm [thread:$0]  %s896, 128, %s893, %s882
        $region84: #{tpu_custom_call.1} parent=59 // pred_fallthru
          _
      $region60: #{tpu_custom_call.1} parent=5 // pred_fallthru
        _
      %p899 = scmp.le.s32.totalorder 2, %s27
      // Predicated region
      $region85: #{tpu_custom_call.1} parent=5 // pred_check
        %p900 = pneg %p899
      $region86: #{tpu_custom_call.1} parent=5 // pred_check_branch
        %902 = sbr.rel (%p900) target = $region88
      $region87: #{tpu_custom_call.1} parent=5 // pred_region
        %s903 = ssub.s32 %s27, 2
        // Predicated region
        $region89: #{tpu_custom_call.1} parent=87 // pred_check
          %p904 = pneg %p281
        $region90: #{tpu_custom_call.1} parent=87 // pred_check_branch
          %906 = sbr.rel (%p904) target = $region92
        $region91: #{tpu_custom_call.1} parent=87 // pred_region
          %s907 = sand.u32 %s266, 1
          %s908 = scalar_lea.sflag [#allocation5], %s907
          %s909 = sand.u32 %s266, 1
          %s910 = smul.addr %s909, 8
          %s911 = scalar_lea.vmem [#allocation12], %s910
          %912 = dma.done %s908, 128
        $region92: #{tpu_custom_call.1} parent=87 // pred_fallthru
          _
      $region88: #{tpu_custom_call.1} parent=5 // pred_fallthru
        _
    $region6: #{tpu_custom_call.1} parent=1 // loop_footer
      %s31 = sadd.s32 1, %s27
    $region7: #{tpu_custom_call.1} parent=1 // loop_footer_branch
      %26 = sbr.rel target = $region3
    $region8: #{tpu_custom_call.1} parent=1 // loop_exit
      _
    %913 = vsyncpa [#allocation4], 1
    %s914 = scalar_lea.sflag [#allocation4], 1
    %915 = vsyncpa %s914, 1
    %916 = vsyncpa [#allocation7], 1
    %s917 = scalar_lea.sflag [#allocation7], 1
    %918 = vsyncpa %s917, 1
    %919 = vsyncpa [#allocation10], 1
    %920 = vsyncpa [#allocation5], 1
    %s921 = scalar_lea.sflag [#allocation5], 1
    %922 = vsyncpa %s921, 1

</llo_original>
